<compile_context>
chip_gen: v5e
topology: v5e:2x2
jax: 0.10.0
libtpu: 0.0.40
codegen_flags: <defaults>
</compile_context>

<pallas_src>
import math

import jax
import jax.numpy as jnp
from jax.experimental import pallas as pl
from jax.experimental.pallas import tpu as pltpu


def _round_up(x, m):
    return ((x + m - 1) // m) * m


def _pad2(a, rows, cols):
    pr, pc = rows - a.shape[0], cols - a.shape[1]
    if pr or pc:
        a = jnp.pad(a, ((0, pr), (0, pc)))
    return a


# ---------------------------------------------------------------------------
# Forward kernel: reparameterized weight/bias sample + linear (x @ W^T + b)
# ---------------------------------------------------------------------------
def _mfvi_forward_kernel(x_ref, wm_ref, wlv_ref, eps_w_ref,
                         bm_ref, blv_ref, eps_b_ref, o_ref, acc_ref):
    k = pl.program_id(2)

    @pl.when(k == 0)
    def _():
        acc_ref[...] = jnp.zeros_like(acc_ref)

    # Sampled weight tile, already oriented [tK, tN] (no in-kernel transpose).
    w = wm_ref[...] + eps_w_ref[...] * jnp.exp(0.5 * wlv_ref[...])
    # NOTE: if B is large enough to be MXU-bound, cast x/w to bf16 here
    # (keep preferred_element_type=f32); skipped to stay bit-close to the
    # f32 PyTorch reference.
    acc_ref[...] += jnp.dot(x_ref[...], w, preferred_element_type=jnp.float32)

    @pl.when(k == pl.num_programs(2) - 1)
    def _():
        # Bias sampling hoisted out of the K reduction (done once per tile).
        b = bm_ref[...] + eps_b_ref[...] * jnp.exp(0.5 * blv_ref[...])
        o_ref[...] = (acc_ref[...] + b).astype(o_ref.dtype)


def mfvi_forward(x, weight_mean, weight_logvar, eps_w,
                 bias_mean, bias_logvar, eps_b):
    B, in_dim = x.shape
    out_dim = weight_mean.shape[0]

    # Generation-safe tile sizes (fit comfortably on v7x's 64 MiB VMEM).
    tB = min(_round_up(B, 8), 128)
    tK = min(_round_up(in_dim, 128), 512)
    tN = min(_round_up(out_dim, 128), 512)
    Bp = _round_up(B, tB)
    Kp = _round_up(in_dim, tK)
    Np = _round_up(out_dim, tN)

    # Layout plumbing in the wrapper: transpose weights to [in_dim, out_dim]
    # and zero-pad everything to tile multiples (zero pads -> zero sampled
    # weights/bias, so the padded region contributes nothing).
    x_p = _pad2(x, Bp, Kp)
    wm_t = _pad2(weight_mean.T, Kp, Np)
    wlv_t = _pad2(weight_logvar.T, Kp, Np)
    ew_t = _pad2(eps_w.T, Kp, Np)
    bm2 = _pad2(bias_mean.reshape(1, -1), 1, Np)
    blv2 = _pad2(bias_logvar.reshape(1, -1), 1, Np)
    eb2 = _pad2(eps_b.reshape(1, -1), 1, Np)

    grid = (Bp // tB, Np // tN, Kp // tK)
    # TODO(synk): optionally generate eps_w on-chip (pltpu.prng_seed +
    # stateful_normal) to drop one full weight-sized HBM stream; changes the
    # RNG stream vs. the reference so it is left out here.
    y_p = pl.pallas_call(
        _mfvi_forward_kernel,
        out_shape=jax.ShapeDtypeStruct((Bp, Np), jnp.float32),
        grid=grid,
        in_specs=[
            pl.BlockSpec((tB, tK), lambda i, j, k: (i, k)),   # x
            pl.BlockSpec((tK, tN), lambda i, j, k: (k, j)),   # weight_mean^T
            pl.BlockSpec((tK, tN), lambda i, j, k: (k, j)),   # weight_logvar^T
            pl.BlockSpec((tK, tN), lambda i, j, k: (k, j)),   # eps_w^T
            pl.BlockSpec((1, tN), lambda i, j, k: (0, j)),    # bias_mean
            pl.BlockSpec((1, tN), lambda i, j, k: (0, j)),    # bias_logvar
            pl.BlockSpec((1, tN), lambda i, j, k: (0, j)),    # eps_b
        ],
        out_specs=pl.BlockSpec((tB, tN), lambda i, j, k: (i, j)),
        scratch_shapes=[pltpu.VMEM((tB, tN), jnp.float32)],
        compiler_params=pltpu.CompilerParams(
            dimension_semantics=("parallel", "parallel", "arbitrary"),
            vmem_limit_bytes=48 * 1024 * 1024),
    )(x_p, wm_t, wlv_t, ew_t, bm2, blv2, eb2)
    return y_p[:B, :out_dim]


# ---------------------------------------------------------------------------
# KL(q || Laplace prior): tiled elementwise kl_gauss_laplace + full reduction
# ---------------------------------------------------------------------------
_A1, _A2, _A3, _A4, _A5 = (0.254829592, -0.284496736, 1.421413741,
                           -1.453152027, 1.061405429)
_P = 0.3275911
_SQRT_2_OVER_PI = math.sqrt(2.0 / math.pi)
_INV_SQRT2 = 1.0 / math.sqrt(2.0)


def _make_kl_kernel(prior_b, out_dim, in_dim, tR, tC):
    const = (math.log(2.0) + math.log(prior_b)
             - 0.5 * math.log(2.0 * math.pi) - 0.5)
    inv_b = 1.0 / prior_b

    def _kl_elem(mu, logvar):
        sigma = jnp.exp(0.5 * logvar)
        inv_sigma = jnp.exp(-0.5 * logvar)          # replaces per-elem divide
        z = mu * inv_sigma                          # mu / sigma
        e = jnp.exp(-0.5 * z * z)                   # shared: erf tail == term1 exp
        term1 = _SQRT_2_OVER_PI * sigma * e
        xx = z * _INV_SQRT2
        t = 1.0 / (1.0 + _P * jnp.abs(xx))
        poly = t * (_A1 + t * (_A2 + t * (_A3 + t * (_A4 + t * _A5))))  # Horner
        erf = jnp.sign(xx) * (1.0 - poly * e)
        term2 = mu * erf
        return (const - 0.5 * logvar) + (term1 + term2) * inv_b

    def kernel(wm_ref, wlv_ref, bm_ref, blv_ref, o_ref, acc_ref):
        i = pl.program_id(0)
        j = pl.program_id(1)
        ni = pl.num_programs(0)
        nj = pl.num_programs(1)

        @pl.when(jnp.logical_and(i == 0, j == 0))
        def _():
            # Init accumulator with the (masked) bias KL.
            bcols = jax.lax.broadcasted_iota(jnp.int32, bm_ref.shape, 1)
            bkl = _kl_elem(bm_ref[...], blv_ref[...])
            acc_ref[...] = jnp.sum(jnp.where(bcols < out_dim, bkl, 0.0),
                                   keepdims=True)

        rows = i * tR + jax.lax.broadcasted_iota(jnp.int32, (tR, tC), 0)
        cols = j * tC + jax.lax.broadcasted_iota(jnp.int32, (tR, tC), 1)
        mask = jnp.logical_and(rows < out_dim, cols < in_dim)
        wkl = _kl_elem(wm_ref[...], wlv_ref[...])
        acc_ref[...] += jnp.sum(jnp.where(mask, wkl, 0.0), keepdims=True)

        @pl.when(jnp.logical_and(i == ni - 1, j == nj - 1))
        def _():
            o_ref[...] = acc_ref[...]

    return kernel


def mfvi_kl_term(weight_mean, weight_logvar, bias_mean, bias_logvar,
                 prior_b=0.1):
    out_dim, in_dim = weight_mean.shape

    tR = min(_round_up(out_dim, 8), 256)
    tC = min(_round_up(in_dim, 128), 512)
    Rp = _round_up(out_dim, tR)
    Cp = _round_up(in_dim, tC)
    Nb = _round_up(out_dim, 128)

    wm_p = _pad2(weight_mean, Rp, Cp)
    wlv_p = _pad2(weight_logvar, Rp, Cp)
    bm2 = _pad2(bias_mean.reshape(1, -1), 1, Nb)
    blv2 = _pad2(bias_logvar.reshape(1, -1), 1, Nb)

    grid = (Rp // tR, Cp // tC)
    res = pl.pallas_call(
        _make_kl_kernel(prior_b, out_dim, in_dim, tR, tC),
        out_shape=jax.ShapeDtypeStruct((1, 1), jnp.float32),
        grid=grid,
        in_specs=[
            pl.BlockSpec((tR, tC), lambda i, j: (i, j)),   # weight_mean
            pl.BlockSpec((tR, tC), lambda i, j: (i, j)),   # weight_logvar
            pl.BlockSpec((1, Nb), lambda i, j: (0, 0)),    # bias_mean (pinned)
            pl.BlockSpec((1, Nb), lambda i, j: (0, 0)),    # bias_logvar (pinned)
        ],
        out_specs=pl.BlockSpec((1, 1), lambda i, j: (0, 0)),
        scratch_shapes=[pltpu.VMEM((1, 1), jnp.float32)],
        compiler_params=pltpu.CompilerParams(
            dimension_semantics=("arbitrary", "arbitrary"),
            vmem_limit_bytes=48 * 1024 * 1024),
    )(wm_p, wlv_p, bm2, blv2)
    return res[0, 0]


# ---------------------------------------------------------------------------
# Pure-JAX reference (mirrors the PyTorch module) for verification
# ---------------------------------------------------------------------------
def _forward_ref(x, wm, wlv, eps_w, bm, blv, eps_b):
    w_samp = wm + eps_w * jnp.exp(0.5 * wlv)
    b_samp = bm + eps_b * jnp.exp(0.5 * blv)
    return x @ w_samp.T + b_samp


def _kl_ref(wm, wlv, bm, blv, prior_b):
    def erf_approx(x):
        sign = jnp.sign(x)
        t = 1.0 / (1.0 + _P * jnp.abs(x))
        y = 1.0 - (_A1 * t + _A2 * t ** 2 + _A3 * t ** 3
                   + _A4 * t ** 4 + _A5 * t ** 5) * jnp.exp(-x * x)
        return sign * y

    def kl(mu, logvar):
        sigma = jnp.exp(0.5 * logvar)
        kl_val = (math.log(2.0) + math.log(prior_b)
                  - 0.5 * (math.log(2.0 * math.pi) + logvar) - 0.5)
        term1 = sigma * math.sqrt(2.0 / math.pi) * jnp.exp(
            -0.5 * mu ** 2 / sigma ** 2)
        term2 = mu * erf_approx(mu / (math.sqrt(2.0) * sigma))
        return kl_val + (term1 + term2) / prior_b

    return jnp.sum(kl(wm, wlv)) + jnp.sum(kl(bm, blv))


if __name__ == "__main__":
    # Small, non-tile-aligned shapes to also exercise the padding/mask path.
    B, in_dim, out_dim = 6, 32, 20
    prior_b = 0.1

    key = jax.random.PRNGKey(0)
    k_w, k_b, k_x, k_ew, k_eb = jax.random.split(key, 5)

    # reset_parameters(): kaiming_uniform_(a=sqrt(5)) -> U(-1/sqrt(fan_in), +)
    bound = 1.0 / math.sqrt(in_dim)
    weight_mean = jax.random.uniform(k_w, (out_dim, in_dim), jnp.float32,
                                     -bound, bound)
    weight_logvar = jnp.full((out_dim, in_dim), -6.0, jnp.float32)
    bias_mean = jax.random.uniform(k_b, (out_dim,), jnp.float32, -bound, bound)
    bias_logvar = jnp.full((out_dim,), -6.0, jnp.float32)

    x = jax.random.normal(k_x, (B, in_dim), jnp.float32)
    # Reparameterization noise (generated in glue; kernel consumes it).
    eps_w = jax.random.normal(k_ew, (out_dim, in_dim), jnp.float32)
    eps_b = jax.random.normal(k_eb, (out_dim,), jnp.float32)

    y = mfvi_forward(x, weight_mean, weight_logvar, eps_w,
                     bias_mean, bias_logvar, eps_b)
    kl = mfvi_kl_term(weight_mean, weight_logvar, bias_mean, bias_logvar,
                      prior_b)
    jax.block_until_ready((y, kl))

    y_ref = _forward_ref(x, weight_mean, weight_logvar, eps_w,
                         bias_mean, bias_logvar, eps_b)
    kl_ref = _kl_ref(weight_mean, weight_logvar, bias_mean, bias_logvar,
                     prior_b)

    assert y.shape == (B, out_dim)
    assert jnp.allclose(y, y_ref, atol=1e-4, rtol=1e-5), "forward mismatch"
    assert jnp.allclose(kl, kl_ref, atol=1e-2, rtol=1e-4), "kl mismatch"

    print("KERNEL_OK")
</pallas_src>

<mosaic_0001>
module attributes {stable_mosaic.version = 11 : i64} {
  func.func @_mfvi_forward_kernel(%arg0: i32, %arg1: i32, %arg2: i32, %arg3: memref<8x128xf32, #tpu.memory_space<vmem>>, %arg4: memref<128x128xf32, #tpu.memory_space<vmem>>, %arg5: memref<128x128xf32, #tpu.memory_space<vmem>>, %arg6: memref<128x128xf32, #tpu.memory_space<vmem>>, %arg7: memref<1x128xf32, #tpu.memory_space<vmem>>, %arg8: memref<1x128xf32, #tpu.memory_space<vmem>>, %arg9: memref<1x128xf32, #tpu.memory_space<vmem>>, %arg10: memref<8x128xf32, #tpu.memory_space<vmem>>, %arg11: memref<8x128xf32, #tpu.memory_space<vmem>>) attributes {dimension_semantics = [#tpu.dimension_semantics<parallel>, #tpu.dimension_semantics<parallel>, #tpu.dimension_semantics<arbitrary>], iteration_bounds = array<i64: 1, 1, 1>, scalar_prefetch = 0 : i64, scratch_operands = 1 : i64, tpu.core_type = #tpu.core_type<tc>, window_params = [{transform_indices = @transform_0, window_bounds = array<i64: 8, 128>}, {transform_indices = @transform_1, window_bounds = array<i64: 128, 128>}, {transform_indices = @transform_2, window_bounds = array<i64: 128, 128>}, {transform_indices = @transform_3, window_bounds = array<i64: 128, 128>}, {transform_indices = @transform_4, window_bounds = array<i64: 1, 128>}, {transform_indices = @transform_5, window_bounds = array<i64: 1, 128>}, {transform_indices = @transform_6, window_bounds = array<i64: 1, 128>}, {transform_indices = @transform_7, window_bounds = array<i64: 8, 128>}]} {
    %c0_i32 = arith.constant 0 : i32
    %0 = arith.cmpi eq, %arg2, %c0_i32 : i32
    %1 = arith.extui %0 : i1 to i32
    %c0_i32_0 = arith.constant 0 : i32
    %2 = arith.cmpi ne, %1, %c0_i32_0 : i32
    scf.if %2 {
      %cst_15 = arith.constant 0.000000e+00 : f32
      %19 = vector.broadcast %cst_15 : f32 to vector<8x128xf32>
      %c0_16 = arith.constant 0 : index
      %c0_17 = arith.constant 0 : index
      %20 = vector.load %arg11[%c0_16, %c0_17] : memref<8x128xf32, #tpu.memory_space<vmem>>, vector<8x128xf32>
      tpu.vector_store %arg11[%c0_16, %c0_17], %19 {strides = array<i32>} : memref<8x128xf32, #tpu.memory_space<vmem>>, vector<8x128xf32>,
    } else {
    }
    %c0 = arith.constant 0 : index
    %c0_1 = arith.constant 0 : index
    %3 = vector.load %arg4[%c0, %c0_1] : memref<128x128xf32, #tpu.memory_space<vmem>>, vector<128x128xf32>
    %c0_2 = arith.constant 0 : index
    %c0_3 = arith.constant 0 : index
    %4 = vector.load %arg6[%c0_2, %c0_3] : memref<128x128xf32, #tpu.memory_space<vmem>>, vector<128x128xf32>
    %c0_4 = arith.constant 0 : index
    %c0_5 = arith.constant 0 : index
    %5 = vector.load %arg5[%c0_4, %c0_5] : memref<128x128xf32, #tpu.memory_space<vmem>>, vector<128x128xf32>
    %cst = arith.constant 5.000000e-01 : f32
    %6 = vector.broadcast %cst : f32 to vector<128x128xf32>
    %7 = arith.mulf %6, %5 : vector<128x128xf32>
    %8 = math.exp %7 : vector<128x128xf32>
    %9 = arith.mulf %4, %8 : vector<128x128xf32>
    %10 = arith.addf %3, %9 : vector<128x128xf32>
    %c0_6 = arith.constant 0 : index
    %c0_7 = arith.constant 0 : index
    %11 = vector.load %arg11[%c0_6, %c0_7] : memref<8x128xf32, #tpu.memory_space<vmem>>, vector<8x128xf32>
    %c0_8 = arith.constant 0 : index
    %c0_9 = arith.constant 0 : index
    %12 = vector.load %arg3[%c0_8, %c0_9] : memref<8x128xf32, #tpu.memory_space<vmem>>, vector<8x128xf32>
    %cst_10 = arith.constant dense<0.000000e+00> : vector<8x128xf32>
    %13 = tpu.matmul %12, %10, %cst_10 {dimension_numbers = #tpu.dot_dimension_numbers<[1], [0], [0], [1], [0, 0, 1, 1], [], []>} : vector<8x128xf32>, vector<128x128xf32>, vector<8x128xf32> -> vector<8x128xf32>
    %14 = arith.addf %11, %13 : vector<8x128xf32>
    %c0_11 = arith.constant 0 : index
    %c0_12 = arith.constant 0 : index
    %15 = vector.load %arg11[%c0_11, %c0_12] : memref<8x128xf32, #tpu.memory_space<vmem>>, vector<8x128xf32>
    tpu.vector_store %arg11[%c0_11, %c0_12], %14 {strides = array<i32>} : memref<8x128xf32, #tpu.memory_space<vmem>>, vector<8x128xf32>,
    %c0_i32_13 = arith.constant 0 : i32
    %16 = arith.cmpi eq, %arg2, %c0_i32_13 : i32
    %17 = arith.extui %16 : i1 to i32
    %c0_i32_14 = arith.constant 0 : i32
    %18 = arith.cmpi ne, %17, %c0_i32_14 : i32
    scf.if %18 {
      %c0_15 = arith.constant 0 : index
      %c0_16 = arith.constant 0 : index
      %19 = vector.load %arg7[%c0_15, %c0_16] : memref<1x128xf32, #tpu.memory_space<vmem>>, vector<1x128xf32>
      %c0_17 = arith.constant 0 : index
      %c0_18 = arith.constant 0 : index
      %20 = vector.load %arg9[%c0_17, %c0_18] : memref<1x128xf32, #tpu.memory_space<vmem>>, vector<1x128xf32>
      %c0_19 = arith.constant 0 : index
      %c0_20 = arith.constant 0 : index
      %21 = vector.load %arg8[%c0_19, %c0_20] : memref<1x128xf32, #tpu.memory_space<vmem>>, vector<1x128xf32>
      %cst_21 = arith.constant 5.000000e-01 : f32
      %22 = vector.broadcast %cst_21 : f32 to vector<1x128xf32>
      %23 = arith.mulf %22, %21 : vector<1x128xf32>
      %24 = math.exp %23 : vector<1x128xf32>
      %25 = arith.mulf %20, %24 : vector<1x128xf32>
      %26 = arith.addf %19, %25 : vector<1x128xf32>
      %c0_22 = arith.constant 0 : index
      %c0_23 = arith.constant 0 : index
      %27 = vector.load %arg11[%c0_22, %c0_23] : memref<8x128xf32, #tpu.memory_space<vmem>>, vector<8x128xf32>
      %28 = vector.broadcast %26 : vector<1x128xf32> to vector<8x128xf32>
      %29 = arith.addf %27, %28 : vector<8x128xf32>
      %c0_24 = arith.constant 0 : index
      %c0_25 = arith.constant 0 : index
      %30 = vector.load %arg10[%c0_24, %c0_25] : memref<8x128xf32, #tpu.memory_space<vmem>>, vector<8x128xf32>
      tpu.vector_store %arg10[%c0_24, %c0_25], %29 {strides = array<i32>} : memref<8x128xf32, #tpu.memory_space<vmem>>, vector<8x128xf32>,
    } else {
    }
    return
  }
  func.func @transform_0(%arg0: i32, %arg1: i32, %arg2: i32) -> (i32, i32) {
    %c0_i32 = arith.constant 0 : i32
    return %arg0, %arg2 : i32, i32
  }
  func.func @transform_1(%arg0: i32, %arg1: i32, %arg2: i32) -> (i32, i32) {
    %c0_i32 = arith.constant 0 : i32
    return %arg2, %arg1 : i32, i32
  }
  func.func @transform_2(%arg0: i32, %arg1: i32, %arg2: i32) -> (i32, i32) {
    %c0_i32 = arith.constant 0 : i32
    return %arg2, %arg1 : i32, i32
  }
  func.func @transform_3(%arg0: i32, %arg1: i32, %arg2: i32) -> (i32, i32) {
    %c0_i32 = arith.constant 0 : i32
    return %arg2, %arg1 : i32, i32
  }
  func.func @transform_4(%arg0: i32, %arg1: i32, %arg2: i32) -> (i32, i32) {
    %c0_i32 = arith.constant 0 : i32
    %c0_i32_0 = arith.constant 0 : i32
    return %c0_i32, %arg1 : i32, i32
  }
  func.func @transform_5(%arg0: i32, %arg1: i32, %arg2: i32) -> (i32, i32) {
    %c0_i32 = arith.constant 0 : i32
    %c0_i32_0 = arith.constant 0 : i32
    return %c0_i32, %arg1 : i32, i32
  }
  func.func @transform_6(%arg0: i32, %arg1: i32, %arg2: i32) -> (i32, i32) {
    %c0_i32 = arith.constant 0 : i32
    %c0_i32_0 = arith.constant 0 : i32
    return %c0_i32, %arg1 : i32, i32
  }
  func.func @transform_7(%arg0: i32, %arg1: i32, %arg2: i32) -> (i32, i32) {
    %c0_i32 = arith.constant 0 : i32
    return %arg0, %arg1 : i32, i32
  }
}

</mosaic_0001>

<llo_original>
// kernel: tpu_custom_call.1
$region0: #{tpu_custom_call.1}
  #allocation0 [shape = 'u32[]', space=smem, size = 0x4, offset = 0x4, fixed_abs, tag = 'smem constant byte address 0x4 - core index']
  #allocation1 [shape = 'u32[72,128]{1,0:T(1,128)}', space=vmem, size = 0x9000, scoped, tag = 'internal scratch']
  #allocation2 [shape = 'f32[8,128]{1,0:T(8,128)}', space=vmem, size = 0x1000, scoped, tag = 'scratch operand']
  %s0 = inlined_call_operand.hbm [shape: f32[8,128], index: 0, kind: input, shape index: {}]
  %s1 = inlined_call_operand.hbm [shape: f32[128,128], index: 1, kind: input, shape index: {}]
  %s2 = inlined_call_operand.hbm [shape: f32[128,128], index: 2, kind: input, shape index: {}]
  %s3 = inlined_call_operand.hbm [shape: f32[128,128], index: 3, kind: input, shape index: {}]
  %s4 = inlined_call_operand.vmem [shape: f32[1,128], index: 4, kind: input, shape index: {}]
  %s5 = inlined_call_operand.vmem [shape: f32[1,128], index: 5, kind: input, shape index: {}]
  %s6 = inlined_call_operand.vmem [shape: f32[1,128], index: 6, kind: input, shape index: {}]
  %s7 = inlined_call_operand.hbm [shape: f32[8,128], index: 7, kind: output, shape index: {}]
  %s8 = sld [smem:[#allocation0]]
  $region62: #{tpu_custom_call.1} parent=0
    _
  %s10 = ssub.s32 1, %s8
  %s11 = scalar_select 0, %s10, %s8
  $region1: #{tpu_custom_call.1} parent=0
    #allocation3 [shape = 'u8[4096]{0}', space=vmem, size = 0x1000, scoped, tag = 'input window, operand 0, single buffered']
    #allocation4 [shape = 's32[1]{0}', space=sflag, size = 0x4, scoped, tag = 'scoped memory for tpu_custom_call.1']
    #allocation5 [shape = 's32[1]{0}', space=sflag, size = 0x4, scoped, tag = 'scoped memory for tpu_custom_call.1']
    #allocation6 [shape = 'u8[65536]{0}', space=vmem, size = 0x10000, scoped, tag = 'input window, operand 1, single buffered']
    #allocation7 [shape = 's32[1]{0}', space=sflag, size = 0x4, scoped, tag = 'scoped memory for tpu_custom_call.1']
    #allocation8 [shape = 'u8[65536]{0}', space=vmem, size = 0x10000, scoped, tag = 'input window, operand 2, single buffered']
    #allocation9 [shape = 'u8[65536]{0}', space=vmem, size = 0x10000, scoped, tag = 'input window, operand 3, single buffered']
    #allocation10 [shape = 's32[1]{0}', space=sflag, size = 0x4, scoped, tag = 'scoped memory for tpu_custom_call.1']
    #allocation11 [shape = 'u8[4096]{0}', space=vmem, size = 0x1000, scoped, tag = 'output window, operand 0, single buffered']
    %12 = vsyncpa [#allocation4], 0
    %13 = vsyncpa [#allocation7], 0
    %14 = vsyncpa [#allocation10], 0
    %15 = vsyncpa [#allocation5], 0
    // Predicated region
    $region2: #{tpu_custom_call.1} parent=1 // pred_check
      _
    $region3: #{tpu_custom_call.1} parent=1 // pred_check_branch
      %17 = sbr.rel (0) target = $region5
    $region4: #{tpu_custom_call.1} parent=1 // pred_region
      %19 = vsyncadd [#allocation4], 0
      %s21 = sshll.u32 %s0, 4
      %s22 = int_to_ptr.hbm [resolvable:$true] %s21
      %s23 = sshll.u32 [#allocation3], 4
      %s24 = int_to_ptr.vmem [resolvable:$true] %s23
      %26 = dma.hbm_to_vmem [thread:$0]  %s22, 128, %s24, [#allocation4]
    $region5: #{tpu_custom_call.1} parent=1 // pred_fallthru
      _
    // Predicated region
    $region6: #{tpu_custom_call.1} parent=1 // pred_check
      _
    $region7: #{tpu_custom_call.1} parent=1 // pred_check_branch
      %28 = sbr.rel (0) target = $region9
    $region8: #{tpu_custom_call.1} parent=1 // pred_region
      %30 = vsyncadd [#allocation7], 0
      %s31 = sshll.u32 %s1, 4
      %s32 = int_to_ptr.hbm [resolvable:$true] %s31
      %s33 = sshll.u32 [#allocation6], 4
      %s34 = int_to_ptr.vmem [resolvable:$true] %s33
      %39 = dma.hbm_to_vmem [thread:$0]  %s32, 2048, %s34, [#allocation7], 128, 128, 8
    $region9: #{tpu_custom_call.1} parent=1 // pred_fallthru
      _
    // Predicated region
    $region10: #{tpu_custom_call.1} parent=1 // pred_check
      _
    $region11: #{tpu_custom_call.1} parent=1 // pred_check_branch
      %41 = sbr.rel (0) target = $region13
    $region12: #{tpu_custom_call.1} parent=1 // pred_region
      %43 = vsyncadd [#allocation7], 0
      %s44 = sshll.u32 %s2, 4
      %s45 = int_to_ptr.hbm [resolvable:$true] %s44
      %s46 = sshll.u32 [#allocation8], 4
      %s47 = int_to_ptr.vmem [resolvable:$true] %s46
      %52 = dma.hbm_to_vmem [thread:$0]  %s45, 2048, %s47, [#allocation7], 128, 128, 8
    $region13: #{tpu_custom_call.1} parent=1 // pred_fallthru
      _
    // Predicated region
    $region14: #{tpu_custom_call.1} parent=1 // pred_check
      _
    $region15: #{tpu_custom_call.1} parent=1 // pred_check_branch
      %54 = sbr.rel (0) target = $region17
    $region16: #{tpu_custom_call.1} parent=1 // pred_region
      %56 = vsyncadd [#allocation10], 0
      %s57 = sshll.u32 %s3, 4
      %s58 = int_to_ptr.hbm [resolvable:$true] %s57
      %s59 = sshll.u32 [#allocation9], 4
      %s60 = int_to_ptr.vmem [resolvable:$true] %s59
      %65 = dma.hbm_to_vmem [thread:$0]  %s58, 2048, %s60, [#allocation10], 128, 128, 8
    $region17: #{tpu_custom_call.1} parent=1 // pred_fallthru
      _
    // Predicated region
    $region18: #{tpu_custom_call.1} parent=1 // pred_check
      _
    $region19: #{tpu_custom_call.1} parent=1 // pred_check_branch
      %67 = sbr.rel (0) target = $region21
    $region20: #{tpu_custom_call.1} parent=1 // pred_region
      _
    $region21: #{tpu_custom_call.1} parent=1 // pred_fallthru
      _
    // Predicated region
    $region22: #{tpu_custom_call.1} parent=1 // pred_check
      _
    $region23: #{tpu_custom_call.1} parent=1 // pred_check_branch
      %69 = sbr.rel (0) target = $region25
    $region24: #{tpu_custom_call.1} parent=1 // pred_region
      _
    $region25: #{tpu_custom_call.1} parent=1 // pred_fallthru
      _
    // Predicated region
    $region26: #{tpu_custom_call.1} parent=1 // pred_check
      _
    $region27: #{tpu_custom_call.1} parent=1 // pred_check_branch
      %71 = sbr.rel (0) target = $region29
    $region28: #{tpu_custom_call.1} parent=1 // pred_region
      _
    $region29: #{tpu_custom_call.1} parent=1 // pred_fallthru
      _
    // Predicated region
    $region30: #{tpu_custom_call.1} parent=1 // pred_check
      _
    $region31: #{tpu_custom_call.1} parent=1 // pred_check_branch
      %73 = sbr.rel (0) target = $region33
    $region32: #{tpu_custom_call.1} parent=1 // pred_region
      %75 = dma.done [#allocation4], 128
    $region33: #{tpu_custom_call.1} parent=1 // pred_fallthru
      _
    // Predicated region
    $region34: #{tpu_custom_call.1} parent=1 // pred_check
      _
    $region35: #{tpu_custom_call.1} parent=1 // pred_check_branch
      %77 = sbr.rel (0) target = $region37
    $region36: #{tpu_custom_call.1} parent=1 // pred_region
      %79 = dma.done [#allocation7], 2048
    $region37: #{tpu_custom_call.1} parent=1 // pred_fallthru
      _
    // Predicated region
    $region38: #{tpu_custom_call.1} parent=1 // pred_check
      _
    $region39: #{tpu_custom_call.1} parent=1 // pred_check_branch
      %81 = sbr.rel (0) target = $region41
    $region40: #{tpu_custom_call.1} parent=1 // pred_region
      %83 = dma.done [#allocation7], 2048
    $region41: #{tpu_custom_call.1} parent=1 // pred_fallthru
      _
    // Predicated region
    $region42: #{tpu_custom_call.1} parent=1 // pred_check
      _
    $region43: #{tpu_custom_call.1} parent=1 // pred_check_branch
      %85 = sbr.rel (0) target = $region45
    $region44: #{tpu_custom_call.1} parent=1 // pred_region
      %87 = dma.done [#allocation10], 2048
    $region45: #{tpu_custom_call.1} parent=1 // pred_fallthru
      _
    %p88 = scmp.eq.s32.totalorder 0, 0
    // Predicated region
    $region46: #{tpu_custom_call.1} parent=1 // pred_check
      %p89 = pneg %p88
    $region47: #{tpu_custom_call.1} parent=1 // pred_check_branch
      %91 = sbr.rel (%p89) target = $region49
    $region48: #{tpu_custom_call.1} parent=1 // pred_region
      %92 = vst [vmem:[#allocation2] sm:$0xff] 0.0
    $region49: #{tpu_custom_call.1} parent=1 // pred_fallthru
      _
    %v93 = vld [vmem:[#allocation6] sm:$0xff]
    %v94 = vld [vmem:[#allocation6 + $0x8] sm:$0xff]
    %v95 = vld [vmem:[#allocation6 + $0x10] sm:$0xff]
    %v96 = vld [vmem:[#allocation6 + $0x18] sm:$0xff]
    %v97 = vld [vmem:[#allocation6 + $0x20] sm:$0xff]
    %v98 = vld [vmem:[#allocation6 + $0x28] sm:$0xff]
    %v99 = vld [vmem:[#allocation6 + $0x30] sm:$0xff]
    %v100 = vld [vmem:[#allocation6 + $0x38] sm:$0xff]
    %v101 = vld [vmem:[#allocation6 + $0x40] sm:$0xff]
    %v102 = vld [vmem:[#allocation6 + $0x48] sm:$0xff]
    %v103 = vld [vmem:[#allocation6 + $0x50] sm:$0xff]
    %v104 = vld [vmem:[#allocation6 + $0x58] sm:$0xff]
    %v105 = vld [vmem:[#allocation6 + $0x60] sm:$0xff]
    %v106 = vld [vmem:[#allocation6 + $0x68] sm:$0xff]
    %v107 = vld [vmem:[#allocation6 + $0x70] sm:$0xff]
    %v108 = vld [vmem:[#allocation6 + $0x78] sm:$0xff]
    %v109 = vld [vmem:[#allocation9] sm:$0xff]
    %v110 = vld [vmem:[#allocation9 + $0x8] sm:$0xff]
    %v111 = vld [vmem:[#allocation9 + $0x10] sm:$0xff]
    %v112 = vld [vmem:[#allocation9 + $0x18] sm:$0xff]
    %v113 = vld [vmem:[#allocation9 + $0x20] sm:$0xff]
    %v114 = vld [vmem:[#allocation9 + $0x28] sm:$0xff]
    %v115 = vld [vmem:[#allocation9 + $0x30] sm:$0xff]
    %v116 = vld [vmem:[#allocation9 + $0x38] sm:$0xff]
    %v117 = vld [vmem:[#allocation9 + $0x40] sm:$0xff]
    %v118 = vld [vmem:[#allocation9 + $0x48] sm:$0xff]
    %v119 = vld [vmem:[#allocation9 + $0x50] sm:$0xff]
    %v120 = vld [vmem:[#allocation9 + $0x58] sm:$0xff]
    %v121 = vld [vmem:[#allocation9 + $0x60] sm:$0xff]
    %v122 = vld [vmem:[#allocation9 + $0x68] sm:$0xff]
    %v123 = vld [vmem:[#allocation9 + $0x70] sm:$0xff]
    %v124 = vld [vmem:[#allocation9 + $0x78] sm:$0xff]
    %v125 = vld [vmem:[#allocation8] sm:$0xff]
    %v126 = vld [vmem:[#allocation8 + $0x8] sm:$0xff]
    %v127 = vld [vmem:[#allocation8 + $0x10] sm:$0xff]
    %v128 = vld [vmem:[#allocation8 + $0x18] sm:$0xff]
    %v129 = vld [vmem:[#allocation8 + $0x20] sm:$0xff]
    %v130 = vld [vmem:[#allocation8 + $0x28] sm:$0xff]
    %v131 = vld [vmem:[#allocation8 + $0x30] sm:$0xff]
    %v132 = vld [vmem:[#allocation8 + $0x38] sm:$0xff]
    %v133 = vld [vmem:[#allocation8 + $0x40] sm:$0xff]
    %v134 = vld [vmem:[#allocation8 + $0x48] sm:$0xff]
    %v135 = vld [vmem:[#allocation8 + $0x50] sm:$0xff]
    %v136 = vld [vmem:[#allocation8 + $0x58] sm:$0xff]
    %v137 = vld [vmem:[#allocation8 + $0x60] sm:$0xff]
    %v138 = vld [vmem:[#allocation8 + $0x68] sm:$0xff]
    %v139 = vld [vmem:[#allocation8 + $0x70] sm:$0xff]
    %v140 = vld [vmem:[#allocation8 + $0x78] sm:$0xff]
    %v141 = vmul.f32 %v125, 0.5
    %v142 = vmul.f32 %v126, 0.5
    %v143 = vmul.f32 %v127, 0.5
    %v144 = vmul.f32 %v128, 0.5
    %v145 = vmul.f32 %v129, 0.5
    %v146 = vmul.f32 %v130, 0.5
    %v147 = vmul.f32 %v131, 0.5
    %v148 = vmul.f32 %v132, 0.5
    %v149 = vmul.f32 %v133, 0.5
    %v150 = vmul.f32 %v134, 0.5
    %v151 = vmul.f32 %v135, 0.5
    %v152 = vmul.f32 %v136, 0.5
    %v153 = vmul.f32 %v137, 0.5
    %v154 = vmul.f32 %v138, 0.5
    %v155 = vmul.f32 %v139, 0.5
    %v156 = vmul.f32 %v140, 0.5
    %v157 = vmul.f32 %v141, 1.442695
    %v158 = vpow.pop %v157
    %v159 = vmul.f32 %v142, 1.442695
    %v160 = vpow.pop %v159
    %v161 = vmul.f32 %v143, 1.442695
    %v162 = vpow.pop %v161
    %v163 = vmul.f32 %v144, 1.442695
    %v164 = vpow.pop %v163
    %v165 = vmul.f32 %v145, 1.442695
    %v166 = vpow.pop %v165
    %v167 = vmul.f32 %v146, 1.442695
    %v168 = vpow.pop %v167
    %v169 = vmul.f32 %v147, 1.442695
    %v170 = vpow.pop %v169
    %v171 = vmul.f32 %v148, 1.442695
    %v172 = vpow.pop %v171
    %v173 = vmul.f32 %v149, 1.442695
    %v174 = vpow.pop %v173
    %v175 = vmul.f32 %v150, 1.442695
    %v176 = vpow.pop %v175
    %v177 = vmul.f32 %v151, 1.442695
    %v178 = vpow.pop %v177
    %v179 = vmul.f32 %v152, 1.442695
    %v180 = vpow.pop %v179
    %v181 = vmul.f32 %v153, 1.442695
    %v182 = vpow.pop %v181
    %v183 = vmul.f32 %v154, 1.442695
    %v184 = vpow.pop %v183
    %v185 = vmul.f32 %v155, 1.442695
    %v186 = vpow.pop %v185
    %v187 = vmul.f32 %v156, 1.442695
    %v188 = vpow.pop %v187
    %v189 = vmul.f32 %v109, %v158
    %v190 = vmul.f32 %v110, %v160
    %v191 = vmul.f32 %v111, %v162
    %v192 = vmul.f32 %v112, %v164
    %v193 = vmul.f32 %v113, %v166
    %v194 = vmul.f32 %v114, %v168
    %v195 = vmul.f32 %v115, %v170
    %v196 = vmul.f32 %v116, %v172
    %v197 = vmul.f32 %v117, %v174
    %v198 = vmul.f32 %v118, %v176
    %v199 = vmul.f32 %v119, %v178
    %v200 = vmul.f32 %v120, %v180
    %v201 = vmul.f32 %v121, %v182
    %v202 = vmul.f32 %v122, %v184
    %v203 = vmul.f32 %v123, %v186
    %v204 = vmul.f32 %v124, %v188
    %v205 = vadd.f32 %v93, %v189
    %v206 = vadd.f32 %v94, %v190
    %v207 = vadd.f32 %v95, %v191
    %v208 = vadd.f32 %v96, %v192
    %v209 = vadd.f32 %v97, %v193
    %v210 = vadd.f32 %v98, %v194
    %v211 = vadd.f32 %v99, %v195
    %v212 = vadd.f32 %v100, %v196
    %v213 = vadd.f32 %v101, %v197
    %v214 = vadd.f32 %v102, %v198
    %v215 = vadd.f32 %v103, %v199
    %v216 = vadd.f32 %v104, %v200
    %v217 = vadd.f32 %v105, %v201
    %v218 = vadd.f32 %v106, %v202
    %v219 = vadd.f32 %v107, %v203
    %v220 = vadd.f32 %v108, %v204
    %v221 = vld [vmem:[#allocation2] sm:$0xff]
    %v222 = vld [vmem:[#allocation3] sm:$0xff]
    %223 = vmatpush.msra.mxu0 %v220
    %224 = vmatpush.msra.mxu0 %v219
    %225 = vmatpush.msra.mxu0 %v218
    %226 = vmatpush.msra.mxu0 %v217
    %227 = vmatpush.msra.mxu0 %v216
    %228 = vmatpush.msra.mxu0 %v215
    %229 = vmatpush.msra.mxu0 %v214
    %230 = vmatpush.msra.mxu0 %v213
    %231 = vmatpush.msra.mxu0 %v212
    %232 = vmatpush.msra.mxu0 %v211
    %233 = vmatpush.msra.mxu0 %v210
    %234 = vmatpush.msra.mxu0 %v209
    %235 = vmatpush.msra.mxu0 %v208
    %236 = vmatpush.msra.mxu0 %v207
    %237 = vmatpush.msra.mxu0 %v206
    %238 = vmatpush.msra.mxu0 %v205
    %239 = vmatmul.f32.gmra.mxu0 %v222
    %v240 = vpop.f32.mrf.mxu0
    %v241 = vadd.f32 0.0, %v240
    %242 = vdwg.mxu0
    %v243 = vadd.f32 %v221, %v241
    %244 = vst [vmem:[#allocation2] sm:$0xff] %v243
    // Predicated region
    $region50: #{tpu_custom_call.1} parent=1 // pred_check
      %p245 = pneg %p88
    $region51: #{tpu_custom_call.1} parent=1 // pred_check_branch
      %247 = sbr.rel (%p245) target = $region53
    $region52: #{tpu_custom_call.1} parent=1 // pred_region
      %v248 = vld [vmem:[%s4] sm:$0x1]
      %v249 = vld [vmem:[%s6] sm:$0x1]
      %v250 = vld [vmem:[%s5] sm:$0x1]
      %v251 = vmul.f32 %v250, 0.5
      %v252 = vmul.f32 %v251, 1.442695
      %v253 = vpow.pop %v252
      %v254 = vmul.f32 %v249, %v253
      %v255 = vadd.f32 %v248, %v254
      %v256 = vld [vmem:[#allocation2] sm:$0xff]
      %v258 = vperm.slane %v255, 0
      %v260 = vadd.f32 %v256, %v258
      %261 = vst [vmem:[#allocation11] sm:$0xff] %v260
    $region53: #{tpu_custom_call.1} parent=1 // pred_fallthru
      _
    // Predicated region
    $region54: #{tpu_custom_call.1} parent=1 // pred_check
      _
    $region55: #{tpu_custom_call.1} parent=1 // pred_check_branch
      %263 = sbr.rel (0) target = $region57
    $region56: #{tpu_custom_call.1} parent=1 // pred_region
      %265 = vsyncadd [#allocation5], 0
      %s267 = sshll.u32 [#allocation11], 4
      %s268 = int_to_ptr.vmem [resolvable:$true] %s267
      %s269 = sshll.u32 %s7, 4
      %s270 = int_to_ptr.hbm [resolvable:$true] %s269
      %272 = dma.vmem_to_hbm [thread:$0]  %s268, 128, %s270, [#allocation5]
    $region57: #{tpu_custom_call.1} parent=1 // pred_fallthru
      _
    // Predicated region
    $region58: #{tpu_custom_call.1} parent=1 // pred_check
      _
    $region59: #{tpu_custom_call.1} parent=1 // pred_check_branch
      %274 = sbr.rel (0) target = $region61
    $region60: #{tpu_custom_call.1} parent=1 // pred_region
      %276 = dma.done [#allocation5], 128
    $region61: #{tpu_custom_call.1} parent=1 // pred_fallthru
      _
    %277 = vsyncpa [#allocation4], 1
    %278 = vsyncpa [#allocation7], 1
    %279 = vsyncpa [#allocation10], 1
    %280 = vsyncpa [#allocation5], 1

</llo_original>
